<compile_context>
chip_gen: v6e
topology: v6e:2x2x1
jax: 0.10.0
libtpu: 0.0.40
codegen_flags: <defaults>
</compile_context>

<pallas_src>
import jax
import jax.numpy as jnp
from jax.experimental import pallas as pl
from jax.experimental.pallas import tpu as pltpu


# ----------------------------------------------------------------------------
# helpers
# ----------------------------------------------------------------------------
def _round_up(x, m):
    return ((x + m - 1) // m) * m


def _pad_to(a, shape):
    pads = [(0, t - s) for s, t in zip(a.shape, shape)]
    return jnp.pad(a, pads)


# ----------------------------------------------------------------------------
# fused kernel
# ----------------------------------------------------------------------------
def _fused_mlp_kernel(*refs):
    """refs = (x, mask, w1x, w1m, b1, [w_i, b_i]..., o_ref).

    All weights / biases are lane-padded to multiples of 128, so every dot
    output and the final store are lane-dense. The padded columns are exactly
    zero (zero weights + zero bias, relu(0) == 0), so padding never leaks into
    the real outputs.
    """
    x_ref, m_ref, w1x_ref, w1m_ref, b1_ref = refs[:5]
    o_ref = refs[-1]
    layer_refs = refs[5:-1]                       # (w, b) pairs; last pair = output layer

    # input layer, concat folded into two matmuls (MXU, f32 accumulate)
    h = jnp.dot(x_ref[...], w1x_ref[...], preferred_element_type=jnp.float32)
    h = h + jnp.dot(m_ref[...], w1m_ref[...], preferred_element_type=jnp.float32)
    h = jnp.maximum(h + b1_ref[...], 0.0)

    n_layers = len(layer_refs) // 2
    for li in range(n_layers):
        w_ref = layer_refs[2 * li]
        b_ref = layer_refs[2 * li + 1]
        y = jnp.dot(h, w_ref[...], preferred_element_type=jnp.float32) + b_ref[...]
        if li < n_layers - 1:                     # hidden layers: ReLU; output layer: none
            y = jnp.maximum(y, 0.0)
        h = y

    o_ref[...] = h.astype(o_ref.dtype)


# ----------------------------------------------------------------------------
# parameters
# ----------------------------------------------------------------------------
def init_params(key, input_dim, hidden_sizes, output_dim, dtype=jnp.float32):
    """Deterministic init mirroring nn.Linear's default U(-1/sqrt(fan_in), +)."""
    dims = [input_dim] + list(hidden_sizes) + [output_dim]
    params = []
    for i in range(len(dims) - 1):
        fan_in, fan_out = dims[i], dims[i + 1]
        key, kw, kb = jax.random.split(key, 3)
        bound = 1.0 / (fan_in ** 0.5)
        # stored as [in, out] (transpose of torch's [out, in])
        w = jax.random.uniform(kw, (fan_in, fan_out), dtype, -bound, bound)
        b = jax.random.uniform(kb, (fan_out,), dtype, -bound, bound)
        params.append((w, b))
    return params


def prepare_fused_params(params, flat_dim, dtype=jnp.float32):
    """One-time prep: split W1 over (x, mask), zero-pad all lane dims to 128.

    Returns a flat list [W1_x, W1_m, b1, W2, b2, ..., W_out, b_out] ready to be
    fed to the fused kernel. For large-batch v6e/v7x deployments, pass
    dtype=jnp.bfloat16 here (f32 accumulation is kept inside the kernel).
    """
    w1, b1 = params[0]
    mask_dim = w1.shape[0] - flat_dim
    h1 = w1.shape[1]
    h1_pad = _round_up(h1, 128)

    fused = [
        _pad_to(w1[:flat_dim], (flat_dim, h1_pad)).astype(dtype),   # W1_x
        _pad_to(w1[flat_dim:], (mask_dim, h1_pad)).astype(dtype),   # W1_m
        _pad_to(b1, (h1_pad,)).reshape(1, h1_pad).astype(dtype),    # b1
    ]
    prev_pad = h1_pad
    for w, b in params[1:]:
        out_dim = w.shape[1]
        out_pad = _round_up(out_dim, 128)
        fused.append(_pad_to(w, (prev_pad, out_pad)).astype(dtype))
        fused.append(_pad_to(b, (out_pad,)).reshape(1, out_pad).astype(dtype))
        prev_pad = out_pad
    return fused


# ----------------------------------------------------------------------------
# forward
# ----------------------------------------------------------------------------
def ffnn_x1_x2_masking_forward(fused_params, x, mask, output_dim):
    """Pallas implementation of FFNNX1_X2Masking.forward(x, mask)."""
    batch = x.shape[0]
    x_flat = x.reshape(batch, -1).astype(jnp.float32)   # x.view(B, -1)
    mask = mask.astype(jnp.float32)
    flat_dim = x_flat.shape[1]
    mask_dim = mask.shape[1]
    out_pad = fused_params[-1].shape[1]

    # batch tile: multiple of 8 sublanes; 256-row tiles + "parallel" grid axis
    # once the batch is large enough to pipeline / shard across TensorCores.
    tb = 256 if batch >= 256 else _round_up(batch, 8)
    b_pad = _round_up(batch, tb)
    if b_pad != batch:
        x_flat = jnp.pad(x_flat, ((0, b_pad - batch), (0, 0)))
        mask = jnp.pad(mask, ((0, b_pad - batch), (0, 0)))

    grid = (b_pad // tb,)

    in_specs = [
        pl.BlockSpec((tb, flat_dim), lambda i: (i, 0)),   # activation tile, pipelined
        pl.BlockSpec((tb, mask_dim), lambda i: (i, 0)),
    ]
    # weights / biases: full blocks, same block index every step -> VMEM resident
    for p in fused_params:
        in_specs.append(pl.BlockSpec(p.shape, lambda i: (0, 0)))
    out_spec = pl.BlockSpec((tb, out_pad), lambda i: (i, 0))

    # advisory cost estimate for XLA's scheduler
    flops_per_row = 2 * flat_dim * fused_params[0].shape[1]
    flops_per_row += 2 * mask_dim * fused_params[1].shape[1]
    i = 3
    while i < len(fused_params):
        w = fused_params[i]
        flops_per_row += 2 * w.shape[0] * w.shape[1]
        i += 2
    bytes_accessed = 4 * (x_flat.size + mask.size
                          + sum(int(p.size) for p in fused_params)
                          + b_pad * out_pad)
    cost = pl.CostEstimate(flops=flops_per_row * b_pad,
                           transcendentals=0,
                           bytes_accessed=bytes_accessed)

    out_padded = pl.pallas_call(
        _fused_mlp_kernel,
        out_shape=jax.ShapeDtypeStruct((b_pad, out_pad), jnp.float32),
        grid=grid,
        in_specs=in_specs,
        out_specs=out_spec,
        compiler_params=pltpu.CompilerParams(dimension_semantics=("parallel",)),
        cost_estimate=cost,
    )(x_flat, mask, *fused_params)

    # strip batch + lane padding
    return out_padded[:batch, :output_dim]


# ----------------------------------------------------------------------------
# demo / self-check
# ----------------------------------------------------------------------------
if __name__ == "__main__":
    key = jax.random.PRNGKey(0)
    key, kx, km = jax.random.split(key, 3)

    # Small shapes consistent with the module's forward:
    batch = 2
    x = jax.random.normal(kx, (batch, 4, 8, 8), jnp.float32)    # flattens to 256
    mask = (jax.random.uniform(km, (batch, 32)) > 0.5).astype(jnp.float32)

    flat_dim = 4 * 8 * 8                 # 256
    mask_dim = 32
    input_dim = flat_dim + mask_dim      # 288
    hidden_sizes = [64, 32]
    output_dim = 8

    params = init_params(key, input_dim, hidden_sizes, output_dim)
    fused_params = prepare_fused_params(params, flat_dim)

    out = ffnn_x1_x2_masking_forward(fused_params, x, mask, output_dim)
    jax.block_until_ready(out)

    # Reference check in plain JAX (same math, unpadded params).
    h_ref = jnp.concatenate([x.reshape(batch, -1), mask], axis=1)
    for w, b in params[:-1]:
        h_ref = jnp.maximum(h_ref @ w + b, 0.0)
    w, b = params[-1]
    ref = h_ref @ w + b

    assert out.shape == (batch, output_dim)
    assert jnp.allclose(out, ref, atol=1e-5, rtol=1e-5)

    print("KERNEL_OK")
</pallas_src>

<mosaic_0001>
module attributes {stable_mosaic.version = 11 : i64} {
  func.func @_fused_mlp_kernel(%arg0: i32, %arg1: memref<8x256xf32, #tpu.memory_space<vmem>>, %arg2: memref<8x32xf32, #tpu.memory_space<vmem>>, %arg3: memref<256x128xf32, #tpu.memory_space<vmem>>, %arg4: memref<32x128xf32, #tpu.memory_space<vmem>>, %arg5: memref<1x128xf32, #tpu.memory_space<vmem>>, %arg6: memref<128x128xf32, #tpu.memory_space<vmem>>, %arg7: memref<1x128xf32, #tpu.memory_space<vmem>>, %arg8: memref<128x128xf32, #tpu.memory_space<vmem>>, %arg9: memref<1x128xf32, #tpu.memory_space<vmem>>, %arg10: memref<8x128xf32, #tpu.memory_space<vmem>>) attributes {dimension_semantics = [#tpu.dimension_semantics<parallel>], iteration_bounds = array<i64: 1>, scalar_prefetch = 0 : i64, scratch_operands = 0 : i64, tpu.core_type = #tpu.core_type<tc>, window_params = [{transform_indices = @transform_0, window_bounds = array<i64: 8, 256>}, {transform_indices = @transform_1, window_bounds = array<i64: 8, 32>}, {pipeline_mode = #tpu.pipeline_mode<synchronous>, transform_indices = @transform_2, window_bounds = array<i64: 256, 128>}, {pipeline_mode = #tpu.pipeline_mode<synchronous>, transform_indices = @transform_3, window_bounds = array<i64: 32, 128>}, {pipeline_mode = #tpu.pipeline_mode<synchronous>, transform_indices = @transform_4, window_bounds = array<i64: 1, 128>}, {pipeline_mode = #tpu.pipeline_mode<synchronous>, transform_indices = @transform_5, window_bounds = array<i64: 128, 128>}, {pipeline_mode = #tpu.pipeline_mode<synchronous>, transform_indices = @transform_6, window_bounds = array<i64: 1, 128>}, {pipeline_mode = #tpu.pipeline_mode<synchronous>, transform_indices = @transform_7, window_bounds = array<i64: 128, 128>}, {pipeline_mode = #tpu.pipeline_mode<synchronous>, transform_indices = @transform_8, window_bounds = array<i64: 1, 128>}, {transform_indices = @transform_9, window_bounds = array<i64: 8, 128>}]} {
    %c0 = arith.constant 0 : index
    %c0_0 = arith.constant 0 : index
    %0 = vector.load %arg1[%c0, %c0_0] : memref<8x256xf32, #tpu.memory_space<vmem>>, vector<8x256xf32>
    %c0_1 = arith.constant 0 : index
    %c0_2 = arith.constant 0 : index
    %1 = vector.load %arg3[%c0_1, %c0_2] : memref<256x128xf32, #tpu.memory_space<vmem>>, vector<256x128xf32>
    %cst = arith.constant dense<0.000000e+00> : vector<8x128xf32>
    %2 = tpu.matmul %0, %1, %cst {dimension_numbers = #tpu.dot_dimension_numbers<[1], [0], [0], [1], [0, 0, 1, 1], [], []>} : vector<8x256xf32>, vector<256x128xf32>, vector<8x128xf32> -> vector<8x128xf32>
    %c0_3 = arith.constant 0 : index
    %c0_4 = arith.constant 0 : index
    %3 = vector.load %arg2[%c0_3, %c0_4] : memref<8x32xf32, #tpu.memory_space<vmem>>, vector<8x32xf32>
    %c0_5 = arith.constant 0 : index
    %c0_6 = arith.constant 0 : index
    %4 = vector.load %arg4[%c0_5, %c0_6] : memref<32x128xf32, #tpu.memory_space<vmem>>, vector<32x128xf32>
    %cst_7 = arith.constant dense<0.000000e+00> : vector<8x128xf32>
    %5 = tpu.matmul %3, %4, %cst_7 {dimension_numbers = #tpu.dot_dimension_numbers<[1], [0], [0], [1], [0, 0, 1, 1], [], []>} : vector<8x32xf32>, vector<32x128xf32>, vector<8x128xf32> -> vector<8x128xf32>
    %6 = arith.addf %2, %5 : vector<8x128xf32>
    %c0_8 = arith.constant 0 : index
    %c0_9 = arith.constant 0 : index
    %7 = vector.load %arg5[%c0_8, %c0_9] : memref<1x128xf32, #tpu.memory_space<vmem>>, vector<1x128xf32>
    %8 = vector.broadcast %7 : vector<1x128xf32> to vector<8x128xf32>
    %9 = arith.addf %6, %8 : vector<8x128xf32>
    %cst_10 = arith.constant 0.000000e+00 : f32
    %10 = vector.broadcast %cst_10 : f32 to vector<8x128xf32>
    %11 = arith.maximumf %9, %10 : vector<8x128xf32>
    %c0_11 = arith.constant 0 : index
    %c0_12 = arith.constant 0 : index
    %12 = vector.load %arg6[%c0_11, %c0_12] : memref<128x128xf32, #tpu.memory_space<vmem>>, vector<128x128xf32>
    %cst_13 = arith.constant dense<0.000000e+00> : vector<8x128xf32>
    %13 = tpu.matmul %11, %12, %cst_13 {dimension_numbers = #tpu.dot_dimension_numbers<[1], [0], [0], [1], [0, 0, 1, 1], [], []>} : vector<8x128xf32>, vector<128x128xf32>, vector<8x128xf32> -> vector<8x128xf32>
    %c0_14 = arith.constant 0 : index
    %c0_15 = arith.constant 0 : index
    %14 = vector.load %arg7[%c0_14, %c0_15] : memref<1x128xf32, #tpu.memory_space<vmem>>, vector<1x128xf32>
    %15 = vector.broadcast %14 : vector<1x128xf32> to vector<8x128xf32>
    %16 = arith.addf %13, %15 : vector<8x128xf32>
    %cst_16 = arith.constant 0.000000e+00 : f32
    %17 = vector.broadcast %cst_16 : f32 to vector<8x128xf32>
    %18 = arith.maximumf %16, %17 : vector<8x128xf32>
    %c0_17 = arith.constant 0 : index
    %c0_18 = arith.constant 0 : index
    %19 = vector.load %arg8[%c0_17, %c0_18] : memref<128x128xf32, #tpu.memory_space<vmem>>, vector<128x128xf32>
    %cst_19 = arith.constant dense<0.000000e+00> : vector<8x128xf32>
    %20 = tpu.matmul %18, %19, %cst_19 {dimension_numbers = #tpu.dot_dimension_numbers<[1], [0], [0], [1], [0, 0, 1, 1], [], []>} : vector<8x128xf32>, vector<128x128xf32>, vector<8x128xf32> -> vector<8x128xf32>
    %c0_20 = arith.constant 0 : index
    %c0_21 = arith.constant 0 : index
    %21 = vector.load %arg9[%c0_20, %c0_21] : memref<1x128xf32, #tpu.memory_space<vmem>>, vector<1x128xf32>
    %22 = vector.broadcast %21 : vector<1x128xf32> to vector<8x128xf32>
    %23 = arith.addf %20, %22 : vector<8x128xf32>
    %c0_22 = arith.constant 0 : index
    %c0_23 = arith.constant 0 : index
    %24 = vector.load %arg10[%c0_22, %c0_23] : memref<8x128xf32, #tpu.memory_space<vmem>>, vector<8x128xf32>
    tpu.vector_store %arg10[%c0_22, %c0_23], %23 {strides = array<i32>} : memref<8x128xf32, #tpu.memory_space<vmem>>, vector<8x128xf32>,
    return
  }
  func.func @transform_0(%arg0: i32) -> (i32, i32) {
    %c0_i32 = arith.constant 0 : i32
    %c0_i32_0 = arith.constant 0 : i32
    return %arg0, %c0_i32 : i32, i32
  }
  func.func @transform_1(%arg0: i32) -> (i32, i32) {
    %c0_i32 = arith.constant 0 : i32
    %c0_i32_0 = arith.constant 0 : i32
    return %arg0, %c0_i32 : i32, i32
  }
  func.func @transform_2(%arg0: i32) -> (i32, i32) {
    %c0_i32 = arith.constant 0 : i32
    %c0_i32_0 = arith.constant 0 : i32
    %c0_i32_1 = arith.constant 0 : i32
    return %c0_i32, %c0_i32_0 : i32, i32
  }
  func.func @transform_3(%arg0: i32) -> (i32, i32) {
    %c0_i32 = arith.constant 0 : i32
    %c0_i32_0 = arith.constant 0 : i32
    %c0_i32_1 = arith.constant 0 : i32
    return %c0_i32, %c0_i32_0 : i32, i32
  }
  func.func @transform_4(%arg0: i32) -> (i32, i32) {
    %c0_i32 = arith.constant 0 : i32
    %c0_i32_0 = arith.constant 0 : i32
    %c0_i32_1 = arith.constant 0 : i32
    return %c0_i32, %c0_i32_0 : i32, i32
  }
  func.func @transform_5(%arg0: i32) -> (i32, i32) {
    %c0_i32 = arith.constant 0 : i32
    %c0_i32_0 = arith.constant 0 : i32
    %c0_i32_1 = arith.constant 0 : i32
    return %c0_i32, %c0_i32_0 : i32, i32
  }
  func.func @transform_6(%arg0: i32) -> (i32, i32) {
    %c0_i32 = arith.constant 0 : i32
    %c0_i32_0 = arith.constant 0 : i32
    %c0_i32_1 = arith.constant 0 : i32
    return %c0_i32, %c0_i32_0 : i32, i32
  }
  func.func @transform_7(%arg0: i32) -> (i32, i32) {
    %c0_i32 = arith.constant 0 : i32
    %c0_i32_0 = arith.constant 0 : i32
    %c0_i32_1 = arith.constant 0 : i32
    return %c0_i32, %c0_i32_0 : i32, i32
  }
  func.func @transform_8(%arg0: i32) -> (i32, i32) {
    %c0_i32 = arith.constant 0 : i32
    %c0_i32_0 = arith.constant 0 : i32
    %c0_i32_1 = arith.constant 0 : i32
    return %c0_i32, %c0_i32_0 : i32, i32
  }
  func.func @transform_9(%arg0: i32) -> (i32, i32) {
    %c0_i32 = arith.constant 0 : i32
    %c0_i32_0 = arith.constant 0 : i32
    return %arg0, %c0_i32 : i32, i32
  }
}

</mosaic_0001>

<llo_original>
// kernel: tpu_custom_call.1
$region0: #{tpu_custom_call.1}
  #allocation0 [shape = 'u32[]', space=smem, size = 0x4, offset = 0x4, fixed_abs, tag = 'smem constant byte address 0x4 - core index']
  #allocation1 [shape = 'u32[144,128]{1,0:T(1,128)}', space=vmem, size = 0x12000, scoped, tag = 'internal scratch']
  %s0 = inlined_call_operand.hbm [shape: f32[8,256], index: 0, kind: input, shape index: {}]
  %s1 = inlined_call_operand.hbm [shape: f32[8,32], index: 1, kind: input, shape index: {}]
  %s2 = inlined_call_operand.hbm [shape: f32[256,128], index: 2, kind: input, shape index: {}]
  %s3 = inlined_call_operand.hbm [shape: f32[32,128], index: 3, kind: input, shape index: {}]
  %s4 = inlined_call_operand.vmem [shape: f32[1,128], index: 4, kind: input, shape index: {}]
  %s5 = inlined_call_operand.hbm [shape: f32[128,128], index: 5, kind: input, shape index: {}]
  %s6 = inlined_call_operand.vmem [shape: f32[1,128], index: 6, kind: input, shape index: {}]
  %s7 = inlined_call_operand.hbm [shape: f32[128,128], index: 7, kind: input, shape index: {}]
  %s8 = inlined_call_operand.vmem [shape: f32[1,128], index: 8, kind: input, shape index: {}]
  %s9 = inlined_call_operand.hbm [shape: f32[8,128], index: 9, kind: output, shape index: {}]
  %s10 = sld [smem:[#allocation0]]
  $region70: #{tpu_custom_call.1} parent=0
    _
  %s12 = ssub.s32 1, %s10
  %s13 = scalar_select 0, %s12, %s10
  $region1: #{tpu_custom_call.1} parent=0
    #allocation2 [shape = 'u8[8192]{0}', space=vmem, size = 0x2000, scoped, tag = 'input window, operand 0, single buffered']
    #allocation3 [shape = 's32[1]{0}', space=sflag, size = 0x4, scoped, tag = 'scoped memory for tpu_custom_call.1']
    #allocation4 [shape = 's32[1]{0}', space=sflag, size = 0x4, scoped, tag = 'scoped memory for tpu_custom_call.1']
    #allocation5 [shape = 'u8[4096]{0}', space=vmem, size = 0x1000, scoped, tag = 'input window, operand 1, single buffered']
    #allocation6 [shape = 's32[1]{0}', space=sflag, size = 0x4, scoped, tag = 'scoped memory for tpu_custom_call.1']
    #allocation7 [shape = 'u8[131072]{0}', space=vmem, size = 0x20000, scoped, tag = 'input window, operand 2, single buffered']
    #allocation8 [shape = 'u8[16384]{0}', space=vmem, size = 0x4000, scoped, tag = 'input window, operand 3, single buffered']
    #allocation9 [shape = 's32[1]{0}', space=sflag, size = 0x4, scoped, tag = 'scoped memory for tpu_custom_call.1']
    #allocation10 [shape = 'u8[65536]{0}', space=vmem, size = 0x10000, scoped, tag = 'input window, operand 5, single buffered']
    #allocation11 [shape = 'u8[65536]{0}', space=vmem, size = 0x10000, scoped, tag = 'input window, operand 7, single buffered']
    #allocation12 [shape = 's32[1]{0}', space=sflag, size = 0x4, scoped, tag = 'scoped memory for tpu_custom_call.1']
    #allocation13 [shape = 'u8[4096]{0}', space=vmem, size = 0x1000, scoped, tag = 'output window, operand 0, single buffered']
    %14 = vsyncpa [#allocation3], 0
    %15 = vsyncpa [#allocation6], 0
    %16 = vsyncpa [#allocation9], 0
    %17 = vsyncpa [#allocation12], 0
    %18 = vsyncpa [#allocation4], 0
    // Predicated region
    $region2: #{tpu_custom_call.1} parent=1 // pred_check
      _
    $region3: #{tpu_custom_call.1} parent=1 // pred_check_branch
      %20 = sbr.rel (0) target = $region5
    $region4: #{tpu_custom_call.1} parent=1 // pred_region
      %s22 = ssub.s32 256, 256
      %23 = vsyncadd [#allocation3], %s22
      %s25 = sshll.u32 [#allocation2], 4
      %s26 = int_to_ptr.vmem [resolvable:$true] %s25
      %28 = dma.hbm_to_vmem [thread:$0]  %s0, 256, %s26, [#allocation3]
    $region5: #{tpu_custom_call.1} parent=1 // pred_fallthru
      _
    // Predicated region
    $region6: #{tpu_custom_call.1} parent=1 // pred_check
      _
    $region7: #{tpu_custom_call.1} parent=1 // pred_check_branch
      %30 = sbr.rel (0) target = $region9
    $region8: #{tpu_custom_call.1} parent=1 // pred_region
      %s32 = ssub.s32 128, 128
      %33 = vsyncadd [#allocation6], %s32
      %s35 = sshll.u32 [#allocation5], 4
      %s36 = int_to_ptr.vmem [resolvable:$true] %s35
      %38 = dma.hbm_to_vmem [thread:$0]  %s1, 128, %s36, [#allocation6]
    $region9: #{tpu_custom_call.1} parent=1 // pred_fallthru
      _
    // Predicated region
    $region10: #{tpu_custom_call.1} parent=1 // pred_check
      _
    $region11: #{tpu_custom_call.1} parent=1 // pred_check_branch
      %40 = sbr.rel (0) target = $region13
    $region12: #{tpu_custom_call.1} parent=1 // pred_region
      %s42 = ssub.s32 4096, 4096
      %43 = vsyncadd [#allocation6], %s42
      %s44 = sshll.u32 [#allocation7], 4
      %s45 = int_to_ptr.vmem [resolvable:$true] %s44
      %50 = dma.hbm_to_vmem [thread:$0]  %s2, 4096, %s45, [#allocation6], 128, 128, 8
    $region13: #{tpu_custom_call.1} parent=1 // pred_fallthru
      _
    // Predicated region
    $region14: #{tpu_custom_call.1} parent=1 // pred_check
      _
    $region15: #{tpu_custom_call.1} parent=1 // pred_check_branch
      %52 = sbr.rel (0) target = $region17
    $region16: #{tpu_custom_call.1} parent=1 // pred_region
      %s54 = ssub.s32 512, 512
      %55 = vsyncadd [#allocation9], %s54
      %s56 = sshll.u32 [#allocation8], 4
      %s57 = int_to_ptr.vmem [resolvable:$true] %s56
      %62 = dma.hbm_to_vmem [thread:$0]  %s3, 512, %s57, [#allocation9], 128, 128, 8
    $region17: #{tpu_custom_call.1} parent=1 // pred_fallthru
      _
    // Predicated region
    $region18: #{tpu_custom_call.1} parent=1 // pred_check
      _
    $region19: #{tpu_custom_call.1} parent=1 // pred_check_branch
      %64 = sbr.rel (0) target = $region21
    $region20: #{tpu_custom_call.1} parent=1 // pred_region
      _
    $region21: #{tpu_custom_call.1} parent=1 // pred_fallthru
      _
    // Predicated region
    $region22: #{tpu_custom_call.1} parent=1 // pred_check
      _
    $region23: #{tpu_custom_call.1} parent=1 // pred_check_branch
      %66 = sbr.rel (0) target = $region25
    $region24: #{tpu_custom_call.1} parent=1 // pred_region
      %s68 = ssub.s32 2048, 2048
      %69 = vsyncadd [#allocation9], %s68
      %s70 = sshll.u32 [#allocation10], 4
      %s71 = int_to_ptr.vmem [resolvable:$true] %s70
      %76 = dma.hbm_to_vmem [thread:$0]  %s5, 2048, %s71, [#allocation9], 128, 128, 8
    $region25: #{tpu_custom_call.1} parent=1 // pred_fallthru
      _
    // Predicated region
    $region26: #{tpu_custom_call.1} parent=1 // pred_check
      _
    $region27: #{tpu_custom_call.1} parent=1 // pred_check_branch
      %78 = sbr.rel (0) target = $region29
    $region28: #{tpu_custom_call.1} parent=1 // pred_region
      _
    $region29: #{tpu_custom_call.1} parent=1 // pred_fallthru
      _
    // Predicated region
    $region30: #{tpu_custom_call.1} parent=1 // pred_check
      _
    $region31: #{tpu_custom_call.1} parent=1 // pred_check_branch
      %80 = sbr.rel (0) target = $region33
    $region32: #{tpu_custom_call.1} parent=1 // pred_region
      %s82 = ssub.s32 2048, 2048
      %83 = vsyncadd [#allocation12], %s82
      %s84 = sshll.u32 [#allocation11], 4
      %s85 = int_to_ptr.vmem [resolvable:$true] %s84
      %90 = dma.hbm_to_vmem [thread:$0]  %s7, 2048, %s85, [#allocation12], 128, 128, 8
    $region33: #{tpu_custom_call.1} parent=1 // pred_fallthru
      _
    // Predicated region
    $region34: #{tpu_custom_call.1} parent=1 // pred_check
      _
    $region35: #{tpu_custom_call.1} parent=1 // pred_check_branch
      %92 = sbr.rel (0) target = $region37
    $region36: #{tpu_custom_call.1} parent=1 // pred_region
      _
    $region37: #{tpu_custom_call.1} parent=1 // pred_fallthru
      _
    // Predicated region
    $region38: #{tpu_custom_call.1} parent=1 // pred_check
      _
    $region39: #{tpu_custom_call.1} parent=1 // pred_check_branch
      %94 = sbr.rel (0) target = $region41
    $region40: #{tpu_custom_call.1} parent=1 // pred_region
      %95 = dma.done [#allocation3], 256
    $region41: #{tpu_custom_call.1} parent=1 // pred_fallthru
      _
    // Predicated region
    $region42: #{tpu_custom_call.1} parent=1 // pred_check
      _
    $region43: #{tpu_custom_call.1} parent=1 // pred_check_branch
      %97 = sbr.rel (0) target = $region45
    $region44: #{tpu_custom_call.1} parent=1 // pred_region
      %98 = dma.done [#allocation6], 128
    $region45: #{tpu_custom_call.1} parent=1 // pred_fallthru
      _
    // Predicated region
    $region46: #{tpu_custom_call.1} parent=1 // pred_check
      _
    $region47: #{tpu_custom_call.1} parent=1 // pred_check_branch
      %100 = sbr.rel (0) target = $region49
    $region48: #{tpu_custom_call.1} parent=1 // pred_region
      %101 = dma.done [#allocation6], 4096
    $region49: #{tpu_custom_call.1} parent=1 // pred_fallthru
      _
    // Predicated region
    $region50: #{tpu_custom_call.1} parent=1 // pred_check
      _
    $region51: #{tpu_custom_call.1} parent=1 // pred_check_branch
      %103 = sbr.rel (0) target = $region53
    $region52: #{tpu_custom_call.1} parent=1 // pred_region
      %104 = dma.done [#allocation9], 512
    $region53: #{tpu_custom_call.1} parent=1 // pred_fallthru
      _
    // Predicated region
    $region54: #{tpu_custom_call.1} parent=1 // pred_check
      _
    $region55: #{tpu_custom_call.1} parent=1 // pred_check_branch
      %106 = sbr.rel (0) target = $region57
    $region56: #{tpu_custom_call.1} parent=1 // pred_region
      %107 = dma.done [#allocation9], 2048
    $region57: #{tpu_custom_call.1} parent=1 // pred_fallthru
      _
    // Predicated region
    $region58: #{tpu_custom_call.1} parent=1 // pred_check
      _
    $region59: #{tpu_custom_call.1} parent=1 // pred_check_branch
      %109 = sbr.rel (0) target = $region61
    $region60: #{tpu_custom_call.1} parent=1 // pred_region
      %110 = dma.done [#allocation12], 2048
    $region61: #{tpu_custom_call.1} parent=1 // pred_fallthru
      _
    %v111 = vld [vmem:[#allocation2] sm:$0xff]
    %v112 = vld [vmem:[#allocation2 + $0x8] sm:$0xff]
    %v113 = vld [vmem:[#allocation7] sm:$0xff]
    %v114 = vld [vmem:[#allocation7 + $0x8] sm:$0xff]
    %v115 = vld [vmem:[#allocation7 + $0x10] sm:$0xff]
    %v116 = vld [vmem:[#allocation7 + $0x18] sm:$0xff]
    %v117 = vld [vmem:[#allocation7 + $0x20] sm:$0xff]
    %v118 = vld [vmem:[#allocation7 + $0x28] sm:$0xff]
    %v119 = vld [vmem:[#allocation7 + $0x30] sm:$0xff]
    %v120 = vld [vmem:[#allocation7 + $0x38] sm:$0xff]
    %v121 = vld [vmem:[#allocation7 + $0x40] sm:$0xff]
    %v122 = vld [vmem:[#allocation7 + $0x48] sm:$0xff]
    %v123 = vld [vmem:[#allocation7 + $0x50] sm:$0xff]
    %v124 = vld [vmem:[#allocation7 + $0x58] sm:$0xff]
    %v125 = vld [vmem:[#allocation7 + $0x60] sm:$0xff]
    %v126 = vld [vmem:[#allocation7 + $0x68] sm:$0xff]
    %v127 = vld [vmem:[#allocation7 + $0x70] sm:$0xff]
    %v128 = vld [vmem:[#allocation7 + $0x78] sm:$0xff]
    %v129 = vld [vmem:[#allocation7 + $0x80] sm:$0xff]
    %v130 = vld [vmem:[#allocation7 + $0x88] sm:$0xff]
    %v131 = vld [vmem:[#allocation7 + $0x90] sm:$0xff]
    %v132 = vld [vmem:[#allocation7 + $0x98] sm:$0xff]
    %v133 = vld [vmem:[#allocation7 + $0xa0] sm:$0xff]
    %v134 = vld [vmem:[#allocation7 + $0xa8] sm:$0xff]
    %v135 = vld [vmem:[#allocation7 + $0xb0] sm:$0xff]
    %v136 = vld [vmem:[#allocation7 + $0xb8] sm:$0xff]
    %v137 = vld [vmem:[#allocation7 + $0xc0] sm:$0xff]
    %v138 = vld [vmem:[#allocation7 + $0xc8] sm:$0xff]
    %v139 = vld [vmem:[#allocation7 + $0xd0] sm:$0xff]
    %v140 = vld [vmem:[#allocation7 + $0xd8] sm:$0xff]
    %v141 = vld [vmem:[#allocation7 + $0xe0] sm:$0xff]
    %v142 = vld [vmem:[#allocation7 + $0xe8] sm:$0xff]
    %v143 = vld [vmem:[#allocation7 + $0xf0] sm:$0xff]
    %v144 = vld [vmem:[#allocation7 + $0xf8] sm:$0xff]
    %v145 = vld [vmem:[#allocation5] sm:$0xff]
    %v146 = vld [vmem:[#allocation8] sm:$0xff]
    %v147 = vld [vmem:[#allocation8 + $0x8] sm:$0xff]
    %v148 = vld [vmem:[#allocation8 + $0x10] sm:$0xff]
    %v149 = vld [vmem:[#allocation8 + $0x18] sm:$0xff]
    %vm150 = vcmask 261120
    %v152 = vsel %vm150, %v145, 0
    %154 = vmatprep.subr.mxu0 0.0
    %155 = vmatpush1.msra.mxu0 0.0
    %156 = vmatprep.subr.mxu0 0.0
    %157 = vmatpush1.msra.mxu0 0.0
    %158 = vmatprep.subr.mxu0 0.0
    %159 = vmatpush1.msra.mxu0 0.0
    %160 = vmatprep.subr.mxu0 0.0
    %161 = vmatpush1.msra.mxu0 0.0
    %162 = vmatprep.subr.mxu0 0.0
    %163 = vmatpush1.msra.mxu0 0.0
    %164 = vmatprep.subr.mxu0 0.0
    %165 = vmatpush1.msra.mxu0 0.0
    %166 = vmatprep.subr.mxu0 0.0
    %167 = vmatpush1.msra.mxu0 0.0
    %168 = vmatprep.subr.mxu0 0.0
    %169 = vmatpush1.msra.mxu0 0.0
    %170 = vmatprep.subr.mxu0 0.0
    %171 = vmatpush1.msra.mxu0 0.0
    %172 = vmatprep.subr.mxu0 0.0
    %173 = vmatpush1.msra.mxu0 0.0
    %174 = vmatprep.subr.mxu0 0.0
    %175 = vmatpush1.msra.mxu0 0.0
    %176 = vmatprep.subr.mxu0 0.0
    %177 = vmatpush1.msra.mxu0 0.0
    %178 = vmatprep.subr.mxu0 0.0
    %179 = vmatpush1.msra.mxu0 %v149
    %180 = vmatprep.subr.mxu0 0.0
    %181 = vmatpush1.msra.mxu0 %v148
    %182 = vmatprep.subr.mxu0 0.0
    %183 = vmatpush1.msra.mxu0 %v147
    %184 = vmatprep.subr.mxu0 0.0
    %185 = vmatpush1.msra.mxu0 %v146
    %186 = vmatprep.subr.mxu0 0.0
    %187 = vmatpush2.msra.mxu0 0.0
    %188 = vmatprep.subr.mxu0 0.0
    %189 = vmatpush2.msra.mxu0 0.0
    %190 = vmatprep.subr.mxu0 0.0
    %191 = vmatpush2.msra.mxu0 0.0
    %192 = vmatprep.subr.mxu0 0.0
    %193 = vmatpush2.msra.mxu0 0.0
    %194 = vmatprep.subr.mxu0 0.0
    %195 = vmatpush2.msra.mxu0 0.0
    %196 = vmatprep.subr.mxu0 0.0
    %197 = vmatpush2.msra.mxu0 0.0
    %198 = vmatprep.subr.mxu0 0.0
    %199 = vmatpush2.msra.mxu0 0.0
    %200 = vmatprep.subr.mxu0 0.0
    %201 = vmatpush2.msra.mxu0 0.0
    %202 = vmatprep.subr.mxu0 0.0
    %203 = vmatpush2.msra.mxu0 0.0
    %204 = vmatprep.subr.mxu0 0.0
    %205 = vmatpush2.msra.mxu0 0.0
    %206 = vmatprep.subr.mxu0 0.0
    %207 = vmatpush2.msra.mxu0 0.0
    %208 = vmatprep.subr.mxu0 0.0
    %209 = vmatpush2.msra.mxu0 0.0
    %210 = vmatprep.subr.mxu0 0.0
    %211 = vmatpush2.msra.mxu0 0.0
    %212 = vmatprep.subr.mxu0 0.0
    %213 = vmatpush2.msra.mxu0 0.0
    %214 = vmatprep.subr.mxu0 0.0
    %215 = vmatpush2.msra.mxu0 0.0
    %216 = vmatprep.subr.mxu0 0.0
    %217 = vmatpush2.msra.mxu0 0.0
    %218 = vmatprep.mubr.f32.mxu0 0.0
    %219 = vmatmul.mubr.f32.gmra.mxu0 %v152
    %v220 = vpop.f32.mrf.mxu0
    %v221 = vadd.f32 0.0, %v220
    %v222 = vpop.f32.mrf.mxu0
    %223 = vdwg.mxu0
    %224 = vmatprep.subr.mxu0 0.0
    %225 = vmatpush1.msra.mxu0 %v128
    %226 = vmatprep.subr.mxu0 0.0
    %227 = vmatpush1.msra.mxu0 %v127
    %228 = vmatprep.subr.mxu0 0.0
    %229 = vmatpush1.msra.mxu0 %v126
    %230 = vmatprep.subr.mxu0 0.0
    %231 = vmatpush1.msra.mxu0 %v125
    %232 = vmatprep.subr.mxu0 0.0
    %233 = vmatpush1.msra.mxu0 %v124
    %234 = vmatprep.subr.mxu0 0.0
    %235 = vmatpush1.msra.mxu0 %v123
    %236 = vmatprep.subr.mxu0 0.0
    %237 = vmatpush1.msra.mxu0 %v122
    %238 = vmatprep.subr.mxu0 0.0
    %239 = vmatpush1.msra.mxu0 %v121
    %240 = vmatprep.subr.mxu0 0.0
    %241 = vmatpush1.msra.mxu0 %v120
    %242 = vmatprep.subr.mxu0 0.0
    %243 = vmatpush1.msra.mxu0 %v119
    %244 = vmatprep.subr.mxu0 0.0
    %245 = vmatpush1.msra.mxu0 %v118
    %246 = vmatprep.subr.mxu0 0.0
    %247 = vmatpush1.msra.mxu0 %v117
    %248 = vmatprep.subr.mxu0 0.0
    %249 = vmatpush1.msra.mxu0 %v116
    %250 = vmatprep.subr.mxu0 0.0
    %251 = vmatpush1.msra.mxu0 %v115
    %252 = vmatprep.subr.mxu0 0.0
    %253 = vmatpush1.msra.mxu0 %v114
    %254 = vmatprep.subr.mxu0 0.0
    %255 = vmatpush1.msra.mxu0 %v113
    %256 = vmatprep.subr.mxu0 0.0
    %257 = vmatpush2.msra.mxu0 %v144
    %258 = vmatprep.subr.mxu0 0.0
    %259 = vmatpush2.msra.mxu0 %v143
    %260 = vmatprep.subr.mxu0 0.0
    %261 = vmatpush2.msra.mxu0 %v142
    %262 = vmatprep.subr.mxu0 0.0
    %263 = vmatpush2.msra.mxu0 %v141
    %264 = vmatprep.subr.mxu0 0.0
    %265 = vmatpush2.msra.mxu0 %v140
    %266 = vmatprep.subr.mxu0 0.0
    %267 = vmatpush2.msra.mxu0 %v139
    %268 = vmatprep.subr.mxu0 0.0
    %269 = vmatpush2.msra.mxu0 %v138
    %270 = vmatprep.subr.mxu0 0.0
    %271 = vmatpush2.msra.mxu0 %v137
    %272 = vmatprep.subr.mxu0 0.0
    %273 = vmatpush2.msra.mxu0 %v136
    %274 = vmatprep.subr.mxu0 0.0
    %275 = vmatpush2.msra.mxu0 %v135
    %276 = vmatprep.subr.mxu0 0.0
    %277 = vmatpush2.msra.mxu0 %v134
    %278 = vmatprep.subr.mxu0 0.0
    %279 = vmatpush2.msra.mxu0 %v133
    %280 = vmatprep.subr.mxu0 0.0
    %281 = vmatpush2.msra.mxu0 %v132
    %282 = vmatprep.subr.mxu0 0.0
    %283 = vmatpush2.msra.mxu0 %v131
    %284 = vmatprep.subr.mxu0 0.0
    %285 = vmatpush2.msra.mxu0 %v130
    %286 = vmatprep.subr.mxu0 0.0
    %287 = vmatpush2.msra.mxu0 %v129
    %288 = vmatprep.mubr.f32.mxu0 %v112
    %289 = vmatmul.mubr.f32.gmra.mxu0 %v111
    %v290 = vpop.f32.mrf.mxu0
    %v291 = vadd.f32 %v221, %v290
    %v292 = vpop.f32.mrf.mxu0
    %293 = vdwg.mxu0
    %v294 = vld [vmem:[%s4] sm:$0x1]
    %v296 = vlaneseq
    %v297 = vshrl.u32 %v296, 7
    %v298 = vsub.s32 0, %v297
    %v299 = vrot.slane %v294, %v298
    %v301 = vadd.f32 %v291, %v299
    %v302 = vmax.f32 %v301, 0.0
    %v303 = vld [vmem:[#allocation10] sm:$0xff]
    %v304 = vld [vmem:[#allocation10 + $0x8] sm:$0xff]
    %v305 = vld [vmem:[#allocation10 + $0x10] sm:$0xff]
    %v306 = vld [vmem:[#allocation10 + $0x18] sm:$0xff]
    %v307 = vld [vmem:[#allocation10 + $0x20] sm:$0xff]
    %v308 = vld [vmem:[#allocation10 + $0x28] sm:$0xff]
    %v309 = vld [vmem:[#allocation10 + $0x30] sm:$0xff]
    %v310 = vld [vmem:[#allocation10 + $0x38] sm:$0xff]
    %v311 = vld [vmem:[#allocation10 + $0x40] sm:$0xff]
    %v312 = vld [vmem:[#allocation10 + $0x48] sm:$0xff]
    %v313 = vld [vmem:[#allocation10 + $0x50] sm:$0xff]
    %v314 = vld [vmem:[#allocation10 + $0x58] sm:$0xff]
    %v315 = vld [vmem:[#allocation10 + $0x60] sm:$0xff]
    %v316 = vld [vmem:[#allocation10 + $0x68] sm:$0xff]
    %v317 = vld [vmem:[#allocation10 + $0x70] sm:$0xff]
    %v318 = vld [vmem:[#allocation10 + $0x78] sm:$0xff]
    %v319 = vld [vmem:[%s6] sm:$0x1]
    %v321 = vlaneseq
    %v322 = vshrl.u32 %v321, 7
    %v323 = vsub.s32 0, %v322
    %v324 = vrot.slane %v319, %v323
    %326 = vmatprep.subr.mxu0 0.0
    %327 = vmatpush1.msra.mxu0 %v318
    %328 = vmatprep.subr.mxu0 0.0
    %329 = vmatpush1.msra.mxu0 %v317
    %330 = vmatprep.subr.mxu0 0.0
    %331 = vmatpush1.msra.mxu0 %v316
    %332 = vmatprep.subr.mxu0 0.0
    %333 = vmatpush1.msra.mxu0 %v315
    %334 = vmatprep.subr.mxu0 0.0
    %335 = vmatpush1.msra.mxu0 %v314
    %336 = vmatprep.subr.mxu0 0.0
    %337 = vmatpush1.msra.mxu0 %v313
    %338 = vmatprep.subr.mxu0 0.0
    %339 = vmatpush1.msra.mxu0 %v312
    %340 = vmatprep.subr.mxu0 0.0
    %341 = vmatpush1.msra.mxu0 %v311
    %342 = vmatprep.subr.mxu0 0.0
    %343 = vmatpush1.msra.mxu0 %v310
    %344 = vmatprep.subr.mxu0 0.0
    %345 = vmatpush1.msra.mxu0 %v309
    %346 = vmatprep.subr.mxu0 0.0
    %347 = vmatpush1.msra.mxu0 %v308
    %348 = vmatprep.subr.mxu0 0.0
    %349 = vmatpush1.msra.mxu0 %v307
    %350 = vmatprep.subr.mxu0 0.0
    %351 = vmatpush1.msra.mxu0 %v306
    %352 = vmatprep.subr.mxu0 0.0
    %353 = vmatpush1.msra.mxu0 %v305
    %354 = vmatprep.subr.mxu0 0.0
    %355 = vmatpush1.msra.mxu0 %v304
    %356 = vmatprep.subr.mxu0 0.0
    %357 = vmatpush1.msra.mxu0 %v303
    %358 = vmatprep.subr.mxu0 0.0
    %359 = vmatpush2.msra.mxu0 0.0
    %360 = vmatprep.subr.mxu0 0.0
    %361 = vmatpush2.msra.mxu0 0.0
    %362 = vmatprep.subr.mxu0 0.0
    %363 = vmatpush2.msra.mxu0 0.0
    %364 = vmatprep.subr.mxu0 0.0
    %365 = vmatpush2.msra.mxu0 0.0
    %366 = vmatprep.subr.mxu0 0.0
    %367 = vmatpush2.msra.mxu0 0.0
    %368 = vmatprep.subr.mxu0 0.0
    %369 = vmatpush2.msra.mxu0 0.0
    %370 = vmatprep.subr.mxu0 0.0
    %371 = vmatpush2.msra.mxu0 0.0
    %372 = vmatprep.subr.mxu0 0.0
    %373 = vmatpush2.msra.mxu0 0.0
    %374 = vmatprep.subr.mxu0 0.0
    %375 = vmatpush2.msra.mxu0 0.0
    %376 = vmatprep.subr.mxu0 0.0
    %377 = vmatpush2.msra.mxu0 0.0
    %378 = vmatprep.subr.mxu0 0.0
    %379 = vmatpush2.msra.mxu0 0.0
    %380 = vmatprep.subr.mxu0 0.0
    %381 = vmatpush2.msra.mxu0 0.0
    %382 = vmatprep.subr.mxu0 0.0
    %383 = vmatpush2.msra.mxu0 0.0
    %384 = vmatprep.subr.mxu0 0.0
    %385 = vmatpush2.msra.mxu0 0.0
    %386 = vmatprep.subr.mxu0 0.0
    %387 = vmatpush2.msra.mxu0 0.0
    %388 = vmatprep.subr.mxu0 0.0
    %389 = vmatpush2.msra.mxu0 0.0
    %390 = vmatprep.mubr.f32.mxu0 0.0
    %391 = vmatmul.mubr.f32.gmra.mxu0 %v302
    %v392 = vpop.f32.mrf.mxu0
    %v393 = vadd.f32 %v324, %v392
    %v394 = vpop.f32.mrf.mxu0
    %395 = vdwg.mxu0
    %v396 = vmax.f32 %v393, 0.0
    %v397 = vld [vmem:[#allocation11] sm:$0xff]
    %v398 = vld [vmem:[#allocation11 + $0x8] sm:$0xff]
    %v399 = vld [vmem:[#allocation11 + $0x10] sm:$0xff]
    %v400 = vld [vmem:[#allocation11 + $0x18] sm:$0xff]
    %v401 = vld [vmem:[#allocation11 + $0x20] sm:$0xff]
    %v402 = vld [vmem:[#allocation11 + $0x28] sm:$0xff]
    %v403 = vld [vmem:[#allocation11 + $0x30] sm:$0xff]
    %v404 = vld [vmem:[#allocation11 + $0x38] sm:$0xff]
    %v405 = vld [vmem:[#allocation11 + $0x40] sm:$0xff]
    %v406 = vld [vmem:[#allocation11 + $0x48] sm:$0xff]
    %v407 = vld [vmem:[#allocation11 + $0x50] sm:$0xff]
    %v408 = vld [vmem:[#allocation11 + $0x58] sm:$0xff]
    %v409 = vld [vmem:[#allocation11 + $0x60] sm:$0xff]
    %v410 = vld [vmem:[#allocation11 + $0x68] sm:$0xff]
    %v411 = vld [vmem:[#allocation11 + $0x70] sm:$0xff]
    %v412 = vld [vmem:[#allocation11 + $0x78] sm:$0xff]
    %v413 = vld [vmem:[%s8] sm:$0x1]
    %v415 = vlaneseq
    %v416 = vshrl.u32 %v415, 7
    %v417 = vsub.s32 0, %v416
    %v418 = vrot.slane %v413, %v417
    %420 = vmatprep.subr.mxu0 0.0
    %421 = vmatpush1.msra.mxu0 %v412
    %422 = vmatprep.subr.mxu0 0.0
    %423 = vmatpush1.msra.mxu0 %v411
    %424 = vmatprep.subr.mxu0 0.0
    %425 = vmatpush1.msra.mxu0 %v410
    %426 = vmatprep.subr.mxu0 0.0
    %427 = vmatpush1.msra.mxu0 %v409
    %428 = vmatprep.subr.mxu0 0.0
    %429 = vmatpush1.msra.mxu0 %v408
    %430 = vmatprep.subr.mxu0 0.0
    %431 = vmatpush1.msra.mxu0 %v407
    %432 = vmatprep.subr.mxu0 0.0
    %433 = vmatpush1.msra.mxu0 %v406
    %434 = vmatprep.subr.mxu0 0.0
    %435 = vmatpush1.msra.mxu0 %v405
    %436 = vmatprep.subr.mxu0 0.0
    %437 = vmatpush1.msra.mxu0 %v404
    %438 = vmatprep.subr.mxu0 0.0
    %439 = vmatpush1.msra.mxu0 %v403
    %440 = vmatprep.subr.mxu0 0.0
    %441 = vmatpush1.msra.mxu0 %v402
    %442 = vmatprep.subr.mxu0 0.0
    %443 = vmatpush1.msra.mxu0 %v401
    %444 = vmatprep.subr.mxu0 0.0
    %445 = vmatpush1.msra.mxu0 %v400
    %446 = vmatprep.subr.mxu0 0.0
    %447 = vmatpush1.msra.mxu0 %v399
    %448 = vmatprep.subr.mxu0 0.0
    %449 = vmatpush1.msra.mxu0 %v398
    %450 = vmatprep.subr.mxu0 0.0
    %451 = vmatpush1.msra.mxu0 %v397
    %452 = vmatprep.subr.mxu0 0.0
    %453 = vmatpush2.msra.mxu0 0.0
    %454 = vmatprep.subr.mxu0 0.0
    %455 = vmatpush2.msra.mxu0 0.0
    %456 = vmatprep.subr.mxu0 0.0
    %457 = vmatpush2.msra.mxu0 0.0
    %458 = vmatprep.subr.mxu0 0.0
    %459 = vmatpush2.msra.mxu0 0.0
    %460 = vmatprep.subr.mxu0 0.0
    %461 = vmatpush2.msra.mxu0 0.0
    %462 = vmatprep.subr.mxu0 0.0
    %463 = vmatpush2.msra.mxu0 0.0
    %464 = vmatprep.subr.mxu0 0.0
    %465 = vmatpush2.msra.mxu0 0.0
    %466 = vmatprep.subr.mxu0 0.0
    %467 = vmatpush2.msra.mxu0 0.0
    %468 = vmatprep.subr.mxu0 0.0
    %469 = vmatpush2.msra.mxu0 0.0
    %470 = vmatprep.subr.mxu0 0.0
    %471 = vmatpush2.msra.mxu0 0.0
    %472 = vmatprep.subr.mxu0 0.0
    %473 = vmatpush2.msra.mxu0 0.0
    %474 = vmatprep.subr.mxu0 0.0
    %475 = vmatpush2.msra.mxu0 0.0
    %476 = vmatprep.subr.mxu0 0.0
    %477 = vmatpush2.msra.mxu0 0.0
    %478 = vmatprep.subr.mxu0 0.0
    %479 = vmatpush2.msra.mxu0 0.0
    %480 = vmatprep.subr.mxu0 0.0
    %481 = vmatpush2.msra.mxu0 0.0
    %482 = vmatprep.subr.mxu0 0.0
    %483 = vmatpush2.msra.mxu0 0.0
    %484 = vmatprep.mubr.f32.mxu0 0.0
    %485 = vmatmul.mubr.f32.gmra.mxu0 %v396
    %v486 = vpop.f32.mrf.mxu0
    %v487 = vadd.f32 %v418, %v486
    %v488 = vpop.f32.mrf.mxu0
    %489 = vdwg.mxu0
    %490 = vst [vmem:[#allocation13] sm:$0xff] %v487
    // Predicated region
    $region62: #{tpu_custom_call.1} parent=1 // pred_check
      _
    $region63: #{tpu_custom_call.1} parent=1 // pred_check_branch
      %492 = sbr.rel (0) target = $region65
    $region64: #{tpu_custom_call.1} parent=1 // pred_region
      %s494 = ssub.s32 128, 128
      %495 = vsyncadd [#allocation4], %s494
      %s497 = sshll.u32 [#allocation13], 4
      %s498 = int_to_ptr.vmem [resolvable:$true] %s497
      %500 = dma.vmem_to_hbm [thread:$0]  %s498, 128, %s9, [#allocation4]
    $region65: #{tpu_custom_call.1} parent=1 // pred_fallthru
      _
    // Predicated region
    $region66: #{tpu_custom_call.1} parent=1 // pred_check
      _
    $region67: #{tpu_custom_call.1} parent=1 // pred_check_branch
      %502 = sbr.rel (0) target = $region69
    $region68: #{tpu_custom_call.1} parent=1 // pred_region
      %503 = dma.done [#allocation4], 128
    $region69: #{tpu_custom_call.1} parent=1 // pred_fallthru
      _
    %504 = vsyncpa [#allocation3], 1
    %505 = vsyncpa [#allocation6], 1
    %506 = vsyncpa [#allocation9], 1
    %507 = vsyncpa [#allocation12], 1
    %508 = vsyncpa [#allocation4], 1

</llo_original>
